<compile_context>
chip_gen: v7x
topology: tpu7x:2x2x1
jax: 0.10.0
libtpu: 0.0.40
codegen_flags: <defaults>
</compile_context>

<pallas_src>
import jax
import jax.numpy as jnp
from jax.experimental import pallas as pl
from jax.experimental.pallas import tpu as pltpu


def _make_kernel(apply_softmax: bool):
    def kernel(q_ref, y_ref, w_ref, b_ref, att_ref, sim_ref):
        # q_ref  : (BB, TQ, Dq) bf16
        # y_ref  : (BB, Ty, Dy) bf16
        # w_ref  : (Dq, Dy)     bf16  (nn.Linear weight, out_features x in_features)
        # b_ref  : (Dq, 1)      bf16  (nn.Linear bias as a column)
        # att_ref: (BB, TQ, Ty) f32
        # sim_ref: (BB, TQ, 1)  f32
        q = q_ref[...]
        y = y_ref[...]
        w = w_ref[...]
        b = b_ref[...]

        BB, TQ, Dq = q.shape
        Dy = w.shape[1]

        # Collapse (BB, TQ) so both shared-weight contractions are plain 2-D
        # MXU matmuls contracting the last dim (no transposes).
        q2 = q.reshape(BB * TQ, Dq)
        p2 = jnp.dot(q2, w, preferred_element_type=jnp.float32)   # (BB*TQ, Dy)
        qb2 = jnp.dot(q2, b, preferred_element_type=jnp.float32)  # (BB*TQ, 1)

        p = p2.astype(y.dtype).reshape(BB, TQ, Dy)
        qb = qb2.reshape(BB, TQ, 1)

        # att = p @ y^T (batched over BB, contracting Dy) + q @ b  -> (BB, TQ, Ty)
        att = jnp.einsum("bqe,bte->bqt", p, y,
                         preferred_element_type=jnp.float32) + qb

        # sim = max over Ty of the PRE-softmax scores, natural (BB, TQ, 1) layout.
        row_max = jnp.max(att, axis=-1, keepdims=True)
        sim_ref[...] = row_max

        if apply_softmax:
            e = jnp.exp(att - row_max)
            denom = jnp.sum(e, axis=-1, keepdims=True)
            att_ref[...] = (e * pl.reciprocal(denom, approx=True)).astype(att_ref.dtype)
        else:
            att_ref[...] = att.astype(att_ref.dtype)

    return kernel


def _pick_blocks(B, Tq, Ty, Dq, Dy, vmem_budget_bytes=16 * 1024 * 1024):
    """Pick (batch_block, tq_block) so double-buffered tiles fit a VMEM budget."""
    tq = min(Tq, 256)

    def per_b(t):
        # per batch element per step: bf16 inputs + f32 outputs, x2 double buffers
        return 2 * (t * Dq * 2 + Ty * Dy * 2 + t * Ty * 4 + t * 4)

    # Shrink tq (keeping it a multiple of 8, or full Tq) if one element is huge.
    while per_b(tq) > vmem_budget_bytes and tq > 8 and tq % 8 == 0:
        tq = max(8, (tq // 2) // 8 * 8)

    bb = max(1, min(B, vmem_budget_bytes // max(per_b(tq), 1)))
    return int(bb), int(tq)


def att_luong(query, y, weight, bias, softmax=True, block_b=None, block_tq=None):
    """Pallas implementation of Att_Luong.forward.

    query : (B, Tq, q_dim) float32
    y     : (B, Ty, y_dim) float32
    weight: (q_dim, y_dim) float32   (nn.Linear weight layout)
    bias  : (q_dim,)       float32
    returns (att, sim): att (B, Tq, Ty) f32, sim (B, 1, Tq) f32
    """
    B, Tq, Dq = query.shape
    By, Ty, Dy = y.shape
    assert By == B and weight.shape == (Dq, Dy) and bias.shape == (Dq,)

    bb, tq = _pick_blocks(B, Tq, Ty, Dq, Dy)
    if block_b is not None:
        bb = min(block_b, B)
    if block_tq is not None:
        tq = min(block_tq, Tq)

    # bf16 operands for the MXU (f32 accumulation inside the kernel).
    q_bf = query.astype(jnp.bfloat16)
    y_bf = y.astype(jnp.bfloat16)
    w_bf = weight.astype(jnp.bfloat16)
    b_bf = bias.reshape(Dq, 1).astype(jnp.bfloat16)

    grid = (pl.cdiv(B, bb), pl.cdiv(Tq, tq))

    # TODO(synk): Ty stays un-padded (non-multiple-of-128 last dim -> masked
    # stores); lane-padding Ty would require -inf masking of the softmax.
    att, sim_raw = pl.pallas_call(
        _make_kernel(softmax),
        out_shape=(
            jax.ShapeDtypeStruct((B, Tq, Ty), jnp.float32),
            jax.ShapeDtypeStruct((B, Tq, 1), jnp.float32),
        ),
        grid_spec=pltpu.PrefetchScalarGridSpec(
            num_scalar_prefetch=0,
            grid=grid,
            in_specs=[
                pl.BlockSpec((bb, tq, Dq), lambda bi, qi: (bi, qi, 0)),
                pl.BlockSpec((bb, Ty, Dy), lambda bi, qi: (bi, 0, 0)),
                pl.BlockSpec((Dq, Dy), lambda bi, qi: (0, 0)),
                pl.BlockSpec((Dq, 1), lambda bi, qi: (0, 0)),
            ],
            out_specs=[
                pl.BlockSpec((bb, tq, Ty), lambda bi, qi: (bi, qi, 0)),
                pl.BlockSpec((bb, tq, 1), lambda bi, qi: (bi, qi, 0)),
            ],
        ),
        compiler_params=pltpu.CompilerParams(
            dimension_semantics=("parallel", "parallel"),
        ),
    )(q_bf, y_bf, w_bf, b_bf)

    # One-time layout fix outside the kernel: (B, Tq, 1) -> (B, 1, Tq).
    sim = jnp.transpose(sim_raw, (0, 2, 1))
    return att, sim


def _reference(query, y, weight, bias, softmax=True):
    wy = jnp.einsum("btd,qd->btq", y, weight) + bias          # (B, Ty, Dq)
    att = jnp.einsum("bqd,btd->bqt", query, wy)               # (B, Tq, Ty)
    sim = jnp.max(att, axis=2)[:, None, :]                    # (B, 1, Tq)
    if softmax:
        att = jax.nn.softmax(att, axis=2)
    return att, sim


if __name__ == "__main__":
    B, Tq, Ty = 2, 8, 16
    q_dim, y_dim = 32, 24

    key = jax.random.PRNGKey(0)
    k1, k2, k3, k4 = jax.random.split(key, 4)
    query = jax.random.normal(k1, (B, Tq, q_dim), dtype=jnp.float32)
    y = jax.random.normal(k2, (B, Ty, y_dim), dtype=jnp.float32)
    weight = jax.random.normal(k3, (q_dim, y_dim), dtype=jnp.float32) * 0.1
    bias = jax.random.normal(k4, (q_dim,), dtype=jnp.float32) * 0.1

    # The kernel computes matmuls on bf16-rounded operands (f32 accumulate),
    # so validate against an f32 reference fed the same rounded inputs.
    q32 = query.astype(jnp.bfloat16).astype(jnp.float32)
    y32 = y.astype(jnp.bfloat16).astype(jnp.float32)
    w32 = weight.astype(jnp.bfloat16).astype(jnp.float32)
    b32 = bias.astype(jnp.bfloat16).astype(jnp.float32)

    for use_softmax in (True, False):
        att, sim = att_luong(query, y, weight, bias, softmax=use_softmax)
        att = jax.block_until_ready(att)
        sim = jax.block_until_ready(sim)

        att_ref, sim_ref = _reference(q32, y32, w32, b32, softmax=use_softmax)
        assert att.shape == (B, Tq, Ty) and sim.shape == (B, 1, Tq)
        if use_softmax:
            assert jnp.allclose(att, att_ref, atol=2e-2, rtol=2e-2), "att mismatch"
        else:
            assert jnp.allclose(att, att_ref, atol=5e-2, rtol=2e-2), "att mismatch"
        assert jnp.allclose(sim, sim_ref, atol=5e-2, rtol=2e-2), "sim mismatch"

    print("KERNEL_OK")
</pallas_src>

<mosaic_0001>
module attributes {stable_mosaic.version = 11 : i64} {
  func.func @kernel(%arg0: i32, %arg1: i32, %arg2: memref<2x8x32xbf16, #tpu.memory_space<vmem>>, %arg3: memref<2x16x24xbf16, #tpu.memory_space<vmem>>, %arg4: memref<32x24xbf16, #tpu.memory_space<vmem>>, %arg5: memref<32x1xbf16, #tpu.memory_space<vmem>>, %arg6: memref<2x8x16xf32, #tpu.memory_space<vmem>>, %arg7: memref<2x8x1xf32, #tpu.memory_space<vmem>>) attributes {dimension_semantics = [#tpu.dimension_semantics<parallel>, #tpu.dimension_semantics<parallel>], iteration_bounds = array<i64: 1, 1>, scalar_prefetch = 0 : i64, scratch_operands = 0 : i64, tpu.core_type = #tpu.core_type<tc>, window_params = [{transform_indices = @transform_0, window_bounds = array<i64: 2, 8, 32>}, {transform_indices = @transform_1, window_bounds = array<i64: 2, 16, 24>}, {pipeline_mode = #tpu.pipeline_mode<synchronous>, transform_indices = @transform_2, window_bounds = array<i64: 32, 24>}, {pipeline_mode = #tpu.pipeline_mode<synchronous>, transform_indices = @transform_3, window_bounds = array<i64: 32, 1>}, {transform_indices = @transform_4, window_bounds = array<i64: 2, 8, 16>}, {transform_indices = @transform_5, window_bounds = array<i64: 2, 8, 1>}]} {
    %c0 = arith.constant 0 : index
    %c0_0 = arith.constant 0 : index
    %c0_1 = arith.constant 0 : index
    %0 = vector.load %arg2[%c0, %c0_0, %c0_1] : memref<2x8x32xbf16, #tpu.memory_space<vmem>>, vector<2x8x32xbf16>
    %c0_2 = arith.constant 0 : index
    %c0_3 = arith.constant 0 : index
    %c0_4 = arith.constant 0 : index
    %1 = vector.load %arg3[%c0_2, %c0_3, %c0_4] : memref<2x16x24xbf16, #tpu.memory_space<vmem>>, vector<2x16x24xbf16>
    %c0_5 = arith.constant 0 : index
    %c0_6 = arith.constant 0 : index
    %2 = vector.load %arg4[%c0_5, %c0_6] : memref<32x24xbf16, #tpu.memory_space<vmem>>, vector<32x24xbf16>
    %c0_7 = arith.constant 0 : index
    %c0_8 = arith.constant 0 : index
    %3 = vector.load %arg5[%c0_7, %c0_8] : memref<32x1xbf16, #tpu.memory_space<vmem>>, vector<32x1xbf16>
    %4 = vector.shape_cast %0 : vector<2x8x32xbf16> to vector<16x32xbf16>
    %cst = arith.constant dense<0.000000e+00> : vector<16x24xf32>
    %5 = tpu.matmul %4, %2, %cst {dimension_numbers = #tpu.dot_dimension_numbers<[1], [0], [0], [1], [0, 0, 1, 1], [], []>} : vector<16x32xbf16>, vector<32x24xbf16>, vector<16x24xf32> -> vector<16x24xf32>
    %cst_9 = arith.constant dense<0.000000e+00> : vector<16x1xf32>
    %6 = tpu.matmul %4, %3, %cst_9 {dimension_numbers = #tpu.dot_dimension_numbers<[1], [0], [0], [1], [0, 0, 1, 1], [], []>} : vector<16x32xbf16>, vector<32x1xbf16>, vector<16x1xf32> -> vector<16x1xf32>
    %7 = arith.truncf %5 : vector<16x24xf32> to vector<16x24xbf16>
    %8 = vector.shape_cast %7 : vector<16x24xbf16> to vector<2x8x24xbf16>
    %9 = vector.shape_cast %6 : vector<16x1xf32> to vector<2x8x1xf32>
    "tpu.trace_start"() <{level = 10 : i32, message = "bqe,bte->bqt"}> : () -> ()
    %cst_10 = arith.constant dense<0.000000e+00> : vector<2x8x16xf32>
    %10 = tpu.matmul %8, %1, %cst_10 {dimension_numbers = #tpu.dot_dimension_numbers<[2], [2], [1], [1], [0, 0, 0, 1, 1, 1], [0], [0]>} : vector<2x8x24xbf16>, vector<2x16x24xbf16>, vector<2x8x16xf32> -> vector<2x8x16xf32>
    "tpu.trace_stop"() : () -> ()
    %11 = vector.broadcast %9 : vector<2x8x1xf32> to vector<2x8x16xf32>
    %12 = arith.addf %10, %11 : vector<2x8x16xf32>
    %cst_11 = arith.constant dense<0xFF800000> : vector<2x8xf32>
    %13 = vector.multi_reduction <maximumf>, %12, %cst_11 [2] : vector<2x8x16xf32> to vector<2x8xf32>
    %14 = vector.shape_cast %13 : vector<2x8xf32> to vector<2x8x1xf32>
    %c0_12 = arith.constant 0 : index
    %c0_13 = arith.constant 0 : index
    %c0_14 = arith.constant 0 : index
    %15 = vector.load %arg7[%c0_12, %c0_13, %c0_14] : memref<2x8x1xf32, #tpu.memory_space<vmem>>, vector<2x8x1xf32>
    tpu.vector_store %arg7[%c0_12, %c0_13, %c0_14], %14 {strides = array<i32>} : memref<2x8x1xf32, #tpu.memory_space<vmem>>, vector<2x8x1xf32>,
    %16 = vector.broadcast %14 : vector<2x8x1xf32> to vector<2x8x16xf32>
    %17 = arith.subf %12, %16 : vector<2x8x16xf32>
    %18 = math.exp %17 : vector<2x8x16xf32>
    %cst_15 = arith.constant dense<0.000000e+00> : vector<2x8xf32>
    %19 = vector.multi_reduction <add>, %18, %cst_15 [2] : vector<2x8x16xf32> to vector<2x8xf32>
    %20 = vector.shape_cast %19 : vector<2x8xf32> to vector<2x8x1xf32>
    %21 = tpu.reciprocal %20 {approx = true} : vector<2x8x1xf32> -> vector<2x8x1xf32>
    %22 = vector.broadcast %21 : vector<2x8x1xf32> to vector<2x8x16xf32>
    %23 = arith.mulf %18, %22 : vector<2x8x16xf32>
    %c0_16 = arith.constant 0 : index
    %c0_17 = arith.constant 0 : index
    %c0_18 = arith.constant 0 : index
    %24 = vector.load %arg6[%c0_16, %c0_17, %c0_18] : memref<2x8x16xf32, #tpu.memory_space<vmem>>, vector<2x8x16xf32>
    tpu.vector_store %arg6[%c0_16, %c0_17, %c0_18], %23 {strides = array<i32>} : memref<2x8x16xf32, #tpu.memory_space<vmem>>, vector<2x8x16xf32>,
    return
  }
  func.func @transform_0(%arg0: i32, %arg1: i32) -> (i32, i32, i32) {
    %c0_i32 = arith.constant 0 : i32
    %c0_i32_0 = arith.constant 0 : i32
    return %arg0, %arg1, %c0_i32 : i32, i32, i32
  }
  func.func @transform_1(%arg0: i32, %arg1: i32) -> (i32, i32, i32) {
    %c0_i32 = arith.constant 0 : i32
    %c0_i32_0 = arith.constant 0 : i32
    %c0_i32_1 = arith.constant 0 : i32
    return %arg0, %c0_i32, %c0_i32_0 : i32, i32, i32
  }
  func.func @transform_2(%arg0: i32, %arg1: i32) -> (i32, i32) {
    %c0_i32 = arith.constant 0 : i32
    %c0_i32_0 = arith.constant 0 : i32
    %c0_i32_1 = arith.constant 0 : i32
    return %c0_i32, %c0_i32_0 : i32, i32
  }
  func.func @transform_3(%arg0: i32, %arg1: i32) -> (i32, i32) {
    %c0_i32 = arith.constant 0 : i32
    %c0_i32_0 = arith.constant 0 : i32
    %c0_i32_1 = arith.constant 0 : i32
    return %c0_i32, %c0_i32_0 : i32, i32
  }
  func.func @transform_4(%arg0: i32, %arg1: i32) -> (i32, i32, i32) {
    %c0_i32 = arith.constant 0 : i32
    %c0_i32_0 = arith.constant 0 : i32
    return %arg0, %arg1, %c0_i32 : i32, i32, i32
  }
  func.func @transform_5(%arg0: i32, %arg1: i32) -> (i32, i32, i32) {
    %c0_i32 = arith.constant 0 : i32
    %c0_i32_0 = arith.constant 0 : i32
    return %arg0, %arg1, %c0_i32 : i32, i32, i32
  }
}

</mosaic_0001>

<llo_original>
// kernel: tpu_custom_call.1
$region0: #{tpu_custom_call.1}
  #allocation0 [shape = 'u32[]', space=smem, size = 0x4, offset = 0x4, fixed_abs, tag = 'smem constant byte address 0x4 - core index']
  #allocation1 [shape = 'u32[144,128]{1,0:T(1,128)}', space=vmem, size = 0x12000, scoped, tag = 'internal scratch']
  %s0 = inlined_call_operand.vmem [shape: bf16[2,8,32], index: 0, kind: input, shape index: {}]
  %s1 = inlined_call_operand.vmem [shape: bf16[2,16,24], index: 1, kind: input, shape index: {}]
  %s2 = inlined_call_operand.vmem [shape: bf16[32,24], index: 2, kind: input, shape index: {}]
  %s3 = inlined_call_operand.vmem [shape: bf16[32,1], index: 3, kind: input, shape index: {}]
  %s4 = inlined_call_operand.hbm [shape: f32[2,8,16], index: 4, kind: output, shape index: {0}]
  %s5 = inlined_call_operand.vmem [shape: f32[2,8,1], index: 5, kind: output, shape index: {1}]
  %6 = xla_tuple %s4, %s5
  %s7 = sld [smem:[#allocation0]]
  $region34: #{tpu_custom_call.1} parent=0
    _
  %s9 = ssub.s32 1, %s7
  %s10 = scalar_select 0, %s9, %s7
  $region1: #{tpu_custom_call.1} parent=0
    #allocation2 [shape = 'u8[8192]{0}', space=vmem, size = 0x2000, scoped, tag = 'output window, operand 0, single buffered']
    #allocation3 [shape = 's32[1]{0}', space=sflag, size = 0x4, scoped, tag = 'scoped memory for tpu_custom_call.1']
    %11 = vsyncpa [#allocation3], 0
    // Predicated region
    $region2: #{tpu_custom_call.1} parent=1 // pred_check
      _
    $region3: #{tpu_custom_call.1} parent=1 // pred_check_branch
      %13 = sbr.rel (0) target = $region5
    $region4: #{tpu_custom_call.1} parent=1 // pred_region
      _
    $region5: #{tpu_custom_call.1} parent=1 // pred_fallthru
      _
    // Predicated region
    $region6: #{tpu_custom_call.1} parent=1 // pred_check
      _
    $region7: #{tpu_custom_call.1} parent=1 // pred_check_branch
      %15 = sbr.rel (0) target = $region9
    $region8: #{tpu_custom_call.1} parent=1 // pred_region
      _
    $region9: #{tpu_custom_call.1} parent=1 // pred_fallthru
      _
    // Predicated region
    $region10: #{tpu_custom_call.1} parent=1 // pred_check
      _
    $region11: #{tpu_custom_call.1} parent=1 // pred_check_branch
      %17 = sbr.rel (0) target = $region13
    $region12: #{tpu_custom_call.1} parent=1 // pred_region
      _
    $region13: #{tpu_custom_call.1} parent=1 // pred_fallthru
      _
    // Predicated region
    $region14: #{tpu_custom_call.1} parent=1 // pred_check
      _
    $region15: #{tpu_custom_call.1} parent=1 // pred_check_branch
      %19 = sbr.rel (0) target = $region17
    $region16: #{tpu_custom_call.1} parent=1 // pred_region
      _
    $region17: #{tpu_custom_call.1} parent=1 // pred_fallthru
      _
    %v21 = vld [vmem:[%s0] sm:$0xf]
    %v22 = vld [vmem:[%s0 + $0x4] sm:$0xf]
    %v23 = vld [vmem:[%s1] sm:$0xf]
    %v24 = vld [vmem:[%s1 + $0x4] sm:$0xf]
    %v25 = vld [vmem:[%s1 + $0x8] sm:$0xf]
    %v26 = vld [vmem:[%s1 + $0xc] sm:$0xf]
    %v27 = vld [vmem:[%s2] sm:$0xf]
    %v28 = vld [vmem:[%s2 + $0x4] sm:$0xf]
    %v29 = vld [vmem:[%s2 + $0x8] sm:$0xf]
    %v30 = vld [vmem:[%s2 + $0xc] sm:$0xf]
    %v31 = vld [vmem:[%s3] sm:$0xf]
    %v32 = vld [vmem:[%s3 + $0x4] sm:$0xf]
    %v33 = vld [vmem:[%s3 + $0x8] sm:$0xf]
    %v34 = vld [vmem:[%s3 + $0xc] sm:$0xf]
    %v37 = vunpack.c.l.b16 %v21
    %v38 = vunpack.c.l.b16 %v22
    %v39 = vpack.c.b16 %v38, %v37
    %v44 = vunpack.c.l.b16 %v27
    %v45 = vunpack.c.l.b16 %v28
    %v46 = vunpack.c.l.b16 %v29
    %v47 = vunpack.c.l.b16 %v30
    %v48 = vpack.c.b16 %v45, %v44
    %v49 = vpack.c.b16 %v47, %v46
    %vm52 = vcmask 261120
    %v54 = vsel %vm52, %v39, 0
    %56 = vmatprep.subr.bf16.mxu0 0
    %57 = vmatpush1.bf16.msra.mxu0 %v48
    %58 = vmatprep.subr.bf16.mxu0 0
    %59 = vmatpush1.bf16.msra.mxu0 %v49
    %60 = vmatprep.subr.bf16.mxu0 0
    %61 = vmatpush1.bf16.msra.mxu0 0
    %62 = vmatprep.subr.bf16.mxu0 0
    %63 = vmatpush1.bf16.msra.mxu0 0
    %64 = vmatprep.subr.bf16.mxu0 0
    %65 = vmatpush1.bf16.msra.mxu0 0
    %66 = vmatprep.subr.bf16.mxu0 0
    %67 = vmatpush1.bf16.msra.mxu0 0
    %68 = vmatprep.subr.bf16.mxu0 0
    %69 = vmatpush1.bf16.msra.mxu0 0
    %70 = vmatprep.subr.bf16.mxu0 0
    %71 = vmatpush1.bf16.msra.mxu0 0
    %72 = vmatprep.subr.bf16.mxu0 0
    %73 = vmatpush1.bf16.msra.mxu0 0
    %74 = vmatprep.subr.bf16.mxu0 0
    %75 = vmatpush1.bf16.msra.mxu0 0
    %76 = vmatprep.subr.bf16.mxu0 0
    %77 = vmatpush1.bf16.msra.mxu0 0
    %78 = vmatprep.subr.bf16.mxu0 0
    %79 = vmatpush1.bf16.msra.mxu0 0
    %80 = vmatprep.subr.bf16.mxu0 0
    %81 = vmatpush1.bf16.msra.mxu0 0
    %82 = vmatprep.subr.bf16.mxu0 0
    %83 = vmatpush1.bf16.msra.mxu0 0
    %84 = vmatprep.subr.bf16.mxu0 0
    %85 = vmatpush1.bf16.msra.mxu0 0
    %86 = vmatprep.subr.bf16.mxu0 0
    %87 = vmatpush1.bf16.msra.mxu0 0
    %88 = vmatprep.mubr.bf16.mxu0 0
    %89 = vmatmul.mubr.bf16.gmra.mrb[0].mxu0 %v54
    %v90 = vpop.f32.mrb[0].mxu0
    %v91 = vadd.f32 0.0, %v90
    %v92 = vpop.f32.mrb[0].mxu0
    %v93 = vpop.f32.mrb[0].mxu0
    %v94 = vadd.f32 0.0, %v93
    %v95 = vpop.f32.mrb[0].mxu0
    %96 = vdwg.mxu0
    %v101 = vunpack.c.l.b16 %v31
    %v102 = vunpack.c.l.b16 %v32
    %v103 = vunpack.c.l.b16 %v33
    %v104 = vunpack.c.l.b16 %v34
    %v105 = vpack.c.b16 %v102, %v101
    %v106 = vpack.c.b16 %v104, %v103
    %109 = vmatprep.subr.bf16.mxu0 0
    %110 = vmatpush1.bf16.msra.mxu0 %v105
    %111 = vmatprep.subr.bf16.mxu0 0
    %112 = vmatpush1.bf16.msra.mxu0 %v106
    %113 = vmatprep.subr.bf16.mxu0 0
    %114 = vmatpush1.bf16.msra.mxu0 0
    %115 = vmatprep.subr.bf16.mxu0 0
    %116 = vmatpush1.bf16.msra.mxu0 0
    %117 = vmatprep.subr.bf16.mxu0 0
    %118 = vmatpush1.bf16.msra.mxu0 0
    %119 = vmatprep.subr.bf16.mxu0 0
    %120 = vmatpush1.bf16.msra.mxu0 0
    %121 = vmatprep.subr.bf16.mxu0 0
    %122 = vmatpush1.bf16.msra.mxu0 0
    %123 = vmatprep.subr.bf16.mxu0 0
    %124 = vmatpush1.bf16.msra.mxu0 0
    %125 = vmatprep.subr.bf16.mxu0 0
    %126 = vmatpush1.bf16.msra.mxu0 0
    %127 = vmatprep.subr.bf16.mxu0 0
    %128 = vmatpush1.bf16.msra.mxu0 0
    %129 = vmatprep.subr.bf16.mxu0 0
    %130 = vmatpush1.bf16.msra.mxu0 0
    %131 = vmatprep.subr.bf16.mxu0 0
    %132 = vmatpush1.bf16.msra.mxu0 0
    %133 = vmatprep.subr.bf16.mxu0 0
    %134 = vmatpush1.bf16.msra.mxu0 0
    %135 = vmatprep.subr.bf16.mxu0 0
    %136 = vmatpush1.bf16.msra.mxu0 0
    %137 = vmatprep.subr.bf16.mxu0 0
    %138 = vmatpush1.bf16.msra.mxu0 0
    %139 = vmatprep.subr.bf16.mxu0 0
    %140 = vmatpush1.bf16.msra.mxu0 0
    %141 = vmatprep.mubr.bf16.mxu0 0
    %142 = vmatmul.mubr.bf16.gmra.mrb[0].mxu0 %v54
    %v143 = vpop.f32.mrb[0].mxu0
    %v144 = vadd.f32 0.0, %v143
    %v145 = vpop.f32.mrb[0].mxu0
    %v146 = vpop.f32.mrb[0].mxu0
    %v147 = vadd.f32 0.0, %v146
    %v148 = vpop.f32.mrb[0].mxu0
    %149 = vdwg.mxu0
    %v150 = vpack.c.bf16 %v94, %v91
    %v152 = vunpack.c.l.b16 %v150
    %v153 = vunpack.c.h.b16 %v150
    %v154 = vpack.c.b16 %v152, %v152
    %v155 = vpack.c.b16 %v153, %v153
    %157 = vset.pattern.permute.xlu0 0
    %158 = vperm.xlu0 %157, %v144
    %v159 = vpop.permute.xlu0 %158
    %162 = vset.pattern.permute.xlu0 0
    %163 = vperm.xlu0 %162, %v147
    %v164 = vpop.permute.xlu0 %163
    %v168 = vunpack.c.l.b16 %v23
    %v169 = vunpack.c.l.b16 %v24
    %v170 = vpack.c.b16 %v169, %v168
    %vm171 = vcmask 195584
    %v173 = vsel %vm171, %v154, 0
    %v176 = vsel %vm171, %v170, 0
    %178 = vmatprep.subr.bf16.mxu0 0
    %179 = vmatpush1.bf16.xpose.msra.mxu0 %v176
    %180 = vmatprep.subr.bf16.mxu0 0
    %181 = vmatpush1.bf16.xpose.msra.mxu0 0
    %182 = vmatprep.subr.bf16.mxu0 0
    %183 = vmatpush1.bf16.xpose.msra.mxu0 0
    %184 = vmatprep.subr.bf16.mxu0 0
    %185 = vmatpush1.bf16.xpose.msra.mxu0 0
    %186 = vmatprep.subr.bf16.mxu0 0
    %187 = vmatpush1.bf16.xpose.msra.mxu0 0
    %188 = vmatprep.subr.bf16.mxu0 0
    %189 = vmatpush1.bf16.xpose.msra.mxu0 0
    %190 = vmatprep.subr.bf16.mxu0 0
    %191 = vmatpush1.bf16.xpose.msra.mxu0 0
    %192 = vmatprep.subr.bf16.mxu0 0
    %193 = vmatpush1.bf16.xpose.msra.mxu0 0
    %194 = vmatprep.subr.bf16.mxu0 0
    %195 = vmatpush1.bf16.xpose.msra.mxu0 0
    %196 = vmatprep.subr.bf16.mxu0 0
    %197 = vmatpush1.bf16.xpose.msra.mxu0 0
    %198 = vmatprep.subr.bf16.mxu0 0
    %199 = vmatpush1.bf16.xpose.msra.mxu0 0
    %200 = vmatprep.subr.bf16.mxu0 0
    %201 = vmatpush1.bf16.xpose.msra.mxu0 0
    %202 = vmatprep.subr.bf16.mxu0 0
    %203 = vmatpush1.bf16.xpose.msra.mxu0 0
    %204 = vmatprep.subr.bf16.mxu0 0
    %205 = vmatpush1.bf16.xpose.msra.mxu0 0
    %206 = vmatprep.subr.bf16.mxu0 0
    %207 = vmatpush1.bf16.xpose.msra.mxu0 0
    %208 = vmatprep.subr.bf16.mxu0 0
    %209 = vmatpush1.bf16.xpose.msra.mxu0 0
    %210 = vmatprep.mubr.bf16.mxu0 0
    %211 = vmatmul.mubr.bf16.gmra.mrb[0].mxu0 %v173
    %v212 = vpop.f32.mrb[0].mxu0
    %v213 = vadd.f32 %v159, %v212
    %v214 = vpop.f32.mrb[0].mxu0
    %v215 = vpop.f32.mrb[0].mxu0
    %v216 = vpop.f32.mrb[0].mxu0
    %217 = vdwg.mxu0
    %v220 = vunpack.c.l.b16 %v25
    %v221 = vunpack.c.l.b16 %v26
    %v222 = vpack.c.b16 %v221, %v220
    %v224 = vsel %vm171, %v155, 0
    %v227 = vsel %vm171, %v222, 0
    %229 = vmatprep.subr.bf16.mxu0 0
    %230 = vmatpush1.bf16.xpose.msra.mxu0 %v227
    %231 = vmatprep.subr.bf16.mxu0 0
    %232 = vmatpush1.bf16.xpose.msra.mxu0 0
    %233 = vmatprep.subr.bf16.mxu0 0
    %234 = vmatpush1.bf16.xpose.msra.mxu0 0
    %235 = vmatprep.subr.bf16.mxu0 0
    %236 = vmatpush1.bf16.xpose.msra.mxu0 0
    %237 = vmatprep.subr.bf16.mxu0 0
    %238 = vmatpush1.bf16.xpose.msra.mxu0 0
    %239 = vmatprep.subr.bf16.mxu0 0
    %240 = vmatpush1.bf16.xpose.msra.mxu0 0
    %241 = vmatprep.subr.bf16.mxu0 0
    %242 = vmatpush1.bf16.xpose.msra.mxu0 0
    %243 = vmatprep.subr.bf16.mxu0 0
    %244 = vmatpush1.bf16.xpose.msra.mxu0 0
    %245 = vmatprep.subr.bf16.mxu0 0
    %246 = vmatpush1.bf16.xpose.msra.mxu0 0
    %247 = vmatprep.subr.bf16.mxu0 0
    %248 = vmatpush1.bf16.xpose.msra.mxu0 0
    %249 = vmatprep.subr.bf16.mxu0 0
    %250 = vmatpush1.bf16.xpose.msra.mxu0 0
    %251 = vmatprep.subr.bf16.mxu0 0
    %252 = vmatpush1.bf16.xpose.msra.mxu0 0
    %253 = vmatprep.subr.bf16.mxu0 0
    %254 = vmatpush1.bf16.xpose.msra.mxu0 0
    %255 = vmatprep.subr.bf16.mxu0 0
    %256 = vmatpush1.bf16.xpose.msra.mxu0 0
    %257 = vmatprep.subr.bf16.mxu0 0
    %258 = vmatpush1.bf16.xpose.msra.mxu0 0
    %259 = vmatprep.subr.bf16.mxu0 0
    %260 = vmatpush1.bf16.xpose.msra.mxu0 0
    %261 = vmatprep.mubr.bf16.mxu0 0
    %262 = vmatmul.mubr.bf16.gmra.mrb[0].mxu0 %v224
    %v263 = vpop.f32.mrb[0].mxu0
    %v264 = vadd.f32 %v164, %v263
    %v265 = vpop.f32.mrb[0].mxu0
    %v266 = vpop.f32.mrb[0].mxu0
    %v267 = vpop.f32.mrb[0].mxu0
    %268 = vdwg.mxu0
    %vm269 = vcmask 130048
    %v270 = vsel %vm269, %v213, -inf
    %271 = vmax.xlane.f32.xlu0 %v270
    %v272 = vpop.xlane.xlu0 %271
    %v273 = vsel %vm269, %v264, -inf
    %274 = vmax.xlane.f32.xlu0 %v273
    %v275 = vpop.xlane.xlu0 %274
    %vm276 = vcmask 7168
    %277 = vst.msk [vmem:[%s5] sm:$0xff] %vm276, %v272
    %278 = vst.msk [vmem:[%s5 + $0x8] sm:$0xff] %vm276, %v275
    %v279 = vsub.f32 %v213, %v272
    %v280 = vsub.f32 %v264, %v275
    %v281 = vmul.f32 %v279, 1.442695
    %v282 = vpow.pop %v281
    %v283 = vmul.f32 %v280, 1.442695
    %v284 = vpow.pop %v283
    %v285 = vsel %vm269, %v282, 0.0
    %286 = vadd.xlane.f32.xlu0 %v285
    %v287 = vpop.xlane.xlu0 %286
    %v288 = vsel %vm269, %v284, 0.0
    %289 = vadd.xlane.f32.xlu0 %v288
    %v290 = vpop.xlane.xlu0 %289
    %v291 = vrcp.pop %v287
    %v292 = vrcp.pop %v290
    %v293 = vmul.f32 %v282, %v291
    %v294 = vmul.f32 %v284, %v292
    %295 = vst.msk [vmem:[#allocation2] sm:$0xff] %vm269, %v293
    %296 = vst.msk [vmem:[#allocation2 + $0x8] sm:$0xff] %vm269, %v294
    // Predicated region
    $region18: #{tpu_custom_call.1} parent=1 // pred_check
      _
    $region19: #{tpu_custom_call.1} parent=1 // pred_check_branch
      %298 = sbr.rel (0) target = $region21
    $region20: #{tpu_custom_call.1} parent=1 // pred_region
      %s300 = ssub.s32 256, 256
      %301 = vsyncadd [#allocation3], %s300
      %s302 = sshll.u32 [#allocation2], 4
      %s303 = int_to_ptr.vmem [resolvable:$true] %s302
      %308 = dma.vmem_to_hbm [thread:$0]  %s303, 256, %s4, [#allocation3], 128, 128, 8
    $region21: #{tpu_custom_call.1} parent=1 // pred_fallthru
      _
    // Predicated region
    $region22: #{tpu_custom_call.1} parent=1 // pred_check
      _
    $region23: #{tpu_custom_call.1} parent=1 // pred_check_branch
      %310 = sbr.rel (0) target = $region25
    $region24: #{tpu_custom_call.1} parent=1 // pred_region
      _
    $region25: #{tpu_custom_call.1} parent=1 // pred_fallthru
      _
    // Predicated region
    $region26: #{tpu_custom_call.1} parent=1 // pred_check
      _
    $region27: #{tpu_custom_call.1} parent=1 // pred_check_branch
      %312 = sbr.rel (0) target = $region29
    $region28: #{tpu_custom_call.1} parent=1 // pred_region
      %313 = dma.done [#allocation3], 256
    $region29: #{tpu_custom_call.1} parent=1 // pred_fallthru
      _
    // Predicated region
    $region30: #{tpu_custom_call.1} parent=1 // pred_check
      _
    $region31: #{tpu_custom_call.1} parent=1 // pred_check_branch
      %315 = sbr.rel (0) target = $region33
    $region32: #{tpu_custom_call.1} parent=1 // pred_region
      _
    $region33: #{tpu_custom_call.1} parent=1 // pred_fallthru
      _
    %316 = vsyncpa [#allocation3], 1

</llo_original>
